<compile_context>
chip_gen: v7x
topology: tpu7x:2x2x1
jax: 0.10.0
libtpu: 0.0.40
codegen_flags: <defaults>
</compile_context>

<pallas_src>
import jax
import jax.numpy as jnp
from jax import lax
from jax.experimental import pallas as pl
from jax.experimental.pallas import tpu as pltpu


def _window_matrix(n, k=3):
    """R[i, t] = 1 iff input index i is covered by kernel tap t (stride 1,
    zero pad k//2, k=3) once the conv output is summed over all output positions."""
    assert k == 3
    r = jnp.ones((n, k), dtype=jnp.float32)
    r = r.at[n - 1, 0].set(0.0)   # tap 0 never covers the last input index
    r = r.at[0, 2].set(0.0)       # tap 2 never covers the first input index
    return r


def _fused_conv_sum_kernel(x_ref, a_ref, b_ref, o_ref):
    # x_ref: (row_tile, Cin*DHW)   a_ref: (Cin*DHW, Cout)   b_ref: (1, Cout)
    # One lane-dense MXU matmul (f32 multi-pass, f32 accumulate) + bias epilogue.
    o_ref[...] = (
        jnp.dot(x_ref[...], a_ref[...], preferred_element_type=jnp.float32)
        + b_ref[...]
    ).astype(o_ref.dtype)


def model_wrapper_forward(x, weight, bias):
    """x: [N, Cin, D, H, W] (NCDHW), weight: [Cout, Cin, 3, 3, 3], bias: [Cout].

    Returns conv3d(x, weight, bias, padding=1).sum(dim=(2, 3, 4)) -> [N, Cout].
    """
    N, Cin, D, H, W = x.shape
    Cout, wc, k, _, _ = weight.shape
    assert wc == Cin and k == 3, "synthetic original_model is Conv3d, 3x3x3, padding=1"
    DHW = D * H * W
    P = DHW
    K = Cin * DHW
    f32 = jnp.float32

    # --- tiny host-side constant prep (one kron chain + one einsum) -------------
    # Q3[d*H*W + h*W + w, kd*9 + kh*3 + kw] = Rd[d,kd] * Rh[h,kh] * Rw[w,kw]
    q3 = jnp.kron(_window_matrix(D), jnp.kron(_window_matrix(H), _window_matrix(W)))  # (DHW, 27)
    w_r = weight.reshape(Cout, Cin, k * k * k).astype(f32)
    # A[c*DHW + j, o] = sum_t Q3[j, t] * w[o, c, t]   (exact: Q3 is 0/1, HIGHEST precision)
    a = jnp.einsum("jt,oct->cjo", q3, w_r,
                   precision=lax.Precision.HIGHEST).reshape(K, Cout)                  # (K, Cout)
    b2 = (float(P) * bias).reshape(1, Cout).astype(f32)                               # P folded in
    x2 = x.reshape(N, K)                                                              # free reshape

    # --- single pallas_call: row tile over N, everything else resident ----------
    row_tile = N if N <= 256 else 256
    grid = (pl.cdiv(N, row_tile),)

    flops = 2 * N * K * Cout
    bytes_accessed = 4 * (N * K + K * Cout + Cout + N * Cout)

    out = pl.pallas_call(
        _fused_conv_sum_kernel,
        out_shape=jax.ShapeDtypeStruct((N, Cout), f32),
        grid_spec=pltpu.PrefetchScalarGridSpec(
            num_scalar_prefetch=0,
            grid=grid,
            in_specs=[
                pl.BlockSpec((row_tile, K), lambda i: (i, 0)),   # x rows, streamed once
                pl.BlockSpec((K, Cout), lambda i: (0, 0)),       # A, resident across grid
                pl.BlockSpec((1, Cout), lambda i: (0, 0)),       # P*bias
            ],
            out_specs=pl.BlockSpec((row_tile, Cout), lambda i: (i, 0)),
        ),
        compiler_params=pltpu.CompilerParams(
            dimension_semantics=("parallel",),   # shards row tiles across v7x's 2 TCs
        ),
        cost_estimate=pl.CostEstimate(
            flops=flops, transcendentals=0, bytes_accessed=bytes_accessed),
    )(x2, a, b2)
    return out


# ---------------------------------------------------------------------------
# Pure-JAX reference (conv3d -> sum over spatial dims) for verification.
# ---------------------------------------------------------------------------
def reference_forward(x, weight, bias):
    conv = lax.conv_general_dilated(
        x, weight,
        window_strides=(1, 1, 1),
        padding="SAME",
        dimension_numbers=("NCDHW", "OIDHW", "NCDHW"),
    )
    conv = conv + bias[None, :, None, None, None]
    return conv.sum(axis=(2, 3, 4))


if __name__ == "__main__":
    # Small, deterministic setup: batch=2, Cin=4, Cout=8, spatial=8^3, kernel=3.
    N, Cin, Cout, D, H, W, k = 2, 4, 8, 8, 8, 8, 3

    key = jax.random.PRNGKey(0)
    kx, kwt, kb = jax.random.split(key, 3)
    x = jax.random.normal(kx, (N, Cin, D, H, W), dtype=jnp.float32)
    weight = jax.random.normal(kwt, (Cout, Cin, k, k, k), dtype=jnp.float32) * 0.1
    bias = jax.random.normal(kb, (Cout,), dtype=jnp.float32) * 0.1

    fwd = jax.jit(model_wrapper_forward)   # fuses the tiny host-side glue into one dispatch
    out = jax.block_until_ready(fwd(x, weight, bias))

    ref = reference_forward(x, weight, bias)
    assert out.shape == (N, Cout), out.shape
    assert jnp.allclose(out, ref, rtol=5e-4, atol=5e-3), (out, ref)

    print("KERNEL_OK")
</pallas_src>

<mosaic_0001>
module attributes {stable_mosaic.version = 11 : i64} {
  func.func @_fused_conv_sum_kernel(%arg0: i32, %arg1: memref<2x2048xf32, #tpu.memory_space<vmem>>, %arg2: memref<2048x8xf32, #tpu.memory_space<vmem>>, %arg3: memref<1x8xf32, #tpu.memory_space<vmem>>, %arg4: memref<2x8xf32, #tpu.memory_space<vmem>>) attributes {dimension_semantics = [#tpu.dimension_semantics<parallel>], iteration_bounds = array<i64: 1>, scalar_prefetch = 0 : i64, scratch_operands = 0 : i64, tpu.core_type = #tpu.core_type<tc>, window_params = [{transform_indices = @transform_0, window_bounds = array<i64: 2, 2048>}, {pipeline_mode = #tpu.pipeline_mode<synchronous>, transform_indices = @transform_1, window_bounds = array<i64: 2048, 8>}, {pipeline_mode = #tpu.pipeline_mode<synchronous>, transform_indices = @transform_2, window_bounds = array<i64: 1, 8>}, {transform_indices = @transform_3, window_bounds = array<i64: 2, 8>}]} {
    %c0 = arith.constant 0 : index
    %c0_0 = arith.constant 0 : index
    %0 = vector.load %arg1[%c0, %c0_0] : memref<2x2048xf32, #tpu.memory_space<vmem>>, vector<2x2048xf32>
    %c0_1 = arith.constant 0 : index
    %c0_2 = arith.constant 0 : index
    %1 = vector.load %arg2[%c0_1, %c0_2] : memref<2048x8xf32, #tpu.memory_space<vmem>>, vector<2048x8xf32>
    %cst = arith.constant dense<0.000000e+00> : vector<2x8xf32>
    %2 = tpu.matmul %0, %1, %cst {dimension_numbers = #tpu.dot_dimension_numbers<[1], [0], [0], [1], [0, 0, 1, 1], [], []>} : vector<2x2048xf32>, vector<2048x8xf32>, vector<2x8xf32> -> vector<2x8xf32>
    %c0_3 = arith.constant 0 : index
    %c0_4 = arith.constant 0 : index
    %3 = vector.load %arg3[%c0_3, %c0_4] : memref<1x8xf32, #tpu.memory_space<vmem>>, vector<1x8xf32>
    %4 = vector.broadcast %3 : vector<1x8xf32> to vector<2x8xf32>
    %5 = arith.addf %2, %4 : vector<2x8xf32>
    %c0_5 = arith.constant 0 : index
    %c0_6 = arith.constant 0 : index
    %6 = vector.load %arg4[%c0_5, %c0_6] : memref<2x8xf32, #tpu.memory_space<vmem>>, vector<2x8xf32>
    tpu.vector_store %arg4[%c0_5, %c0_6], %5 {strides = array<i32>} : memref<2x8xf32, #tpu.memory_space<vmem>>, vector<2x8xf32>,
    return
  }
  func.func @transform_0(%arg0: i32) -> (i32, i32) {
    %c0_i32 = arith.constant 0 : i32
    %c0_i32_0 = arith.constant 0 : i32
    return %arg0, %c0_i32 : i32, i32
  }
  func.func @transform_1(%arg0: i32) -> (i32, i32) {
    %c0_i32 = arith.constant 0 : i32
    %c0_i32_0 = arith.constant 0 : i32
    %c0_i32_1 = arith.constant 0 : i32
    return %c0_i32, %c0_i32_0 : i32, i32
  }
  func.func @transform_2(%arg0: i32) -> (i32, i32) {
    %c0_i32 = arith.constant 0 : i32
    %c0_i32_0 = arith.constant 0 : i32
    %c0_i32_1 = arith.constant 0 : i32
    return %c0_i32, %c0_i32_0 : i32, i32
  }
  func.func @transform_3(%arg0: i32) -> (i32, i32) {
    %c0_i32 = arith.constant 0 : i32
    %c0_i32_0 = arith.constant 0 : i32
    return %arg0, %c0_i32 : i32, i32
  }
}

</mosaic_0001>

<llo_original>
// kernel: model_wrapper_forward.1
$region0: #{model_wrapper_forward.1}
  #allocation0 [shape = 'u32[]', space=smem, size = 0x4, offset = 0x4, fixed_abs, tag = 'smem constant byte address 0x4 - core index']
  #allocation1 [shape = 'u32[144,128]{1,0:T(1,128)}', space=vmem, size = 0x12000, scoped, tag = 'internal scratch']
  %s0 = inlined_call_operand.vmem [shape: f32[2,2048], index: 0, kind: input, shape index: {}]
  %s1 = inlined_call_operand.vmem [shape: f32[2048,8], index: 1, kind: input, shape index: {}]
  %s2 = inlined_call_operand.vmem [shape: f32[1,8], index: 2, kind: input, shape index: {}]
  %s3 = inlined_call_operand.hbm [shape: f32[2,8], index: 3, kind: output, shape index: {}]
  %s4 = sld [smem:[#allocation0]]
  $region22: #{model_wrapper_forward.1} parent=0
    _
  %s6 = ssub.s32 1, %s4
  %s7 = scalar_select 0, %s6, %s4
  $region1: #{model_wrapper_forward.1} parent=0
    #allocation2 [shape = 'u8[1024]{0}', space=vmem, size = 0x400, scoped, tag = 'output window, operand 0, single buffered']
    #allocation3 [shape = 's32[1]{0}', space=sflag, size = 0x4, scoped, tag = 'scoped memory for model_wrapper_forward.1']
    %8 = vsyncpa [#allocation3], 0
    // Predicated region
    $region2: #{model_wrapper_forward.1} parent=1 // pred_check
      _
    $region3: #{model_wrapper_forward.1} parent=1 // pred_check_branch
      %10 = sbr.rel (0) target = $region5
    $region4: #{model_wrapper_forward.1} parent=1 // pred_region
      _
    $region5: #{model_wrapper_forward.1} parent=1 // pred_fallthru
      _
    // Predicated region
    $region6: #{model_wrapper_forward.1} parent=1 // pred_check
      _
    $region7: #{model_wrapper_forward.1} parent=1 // pred_check_branch
      %12 = sbr.rel (0) target = $region9
    $region8: #{model_wrapper_forward.1} parent=1 // pred_region
      _
    $region9: #{model_wrapper_forward.1} parent=1 // pred_fallthru
      _
    // Predicated region
    $region10: #{model_wrapper_forward.1} parent=1 // pred_check
      _
    $region11: #{model_wrapper_forward.1} parent=1 // pred_check_branch
      %14 = sbr.rel (0) target = $region13
    $region12: #{model_wrapper_forward.1} parent=1 // pred_region
      _
    $region13: #{model_wrapper_forward.1} parent=1 // pred_fallthru
      _
    %v15 = vld [vmem:[%s0] sm:$0xff]
    %v16 = vld [vmem:[%s0 + $0x8] sm:$0xff]
    %v17 = vld [vmem:[%s0 + $0x10] sm:$0xff]
    %v18 = vld [vmem:[%s0 + $0x18] sm:$0xff]
    %v19 = vld [vmem:[%s1] sm:$0xff]
    %v20 = vld [vmem:[%s1 + $0x8] sm:$0xff]
    %v21 = vld [vmem:[%s1 + $0x10] sm:$0xff]
    %v22 = vld [vmem:[%s1 + $0x18] sm:$0xff]
    %v23 = vld [vmem:[%s1 + $0x20] sm:$0xff]
    %v24 = vld [vmem:[%s1 + $0x28] sm:$0xff]
    %v25 = vld [vmem:[%s1 + $0x30] sm:$0xff]
    %v26 = vld [vmem:[%s1 + $0x38] sm:$0xff]
    %v27 = vld [vmem:[%s1 + $0x40] sm:$0xff]
    %v28 = vld [vmem:[%s1 + $0x48] sm:$0xff]
    %v29 = vld [vmem:[%s1 + $0x50] sm:$0xff]
    %v30 = vld [vmem:[%s1 + $0x58] sm:$0xff]
    %v31 = vld [vmem:[%s1 + $0x60] sm:$0xff]
    %v32 = vld [vmem:[%s1 + $0x68] sm:$0xff]
    %v33 = vld [vmem:[%s1 + $0x70] sm:$0xff]
    %v34 = vld [vmem:[%s1 + $0x78] sm:$0xff]
    %v35 = vld [vmem:[%s1 + $0x80] sm:$0xff]
    %v36 = vld [vmem:[%s1 + $0x88] sm:$0xff]
    %v37 = vld [vmem:[%s1 + $0x90] sm:$0xff]
    %v38 = vld [vmem:[%s1 + $0x98] sm:$0xff]
    %v39 = vld [vmem:[%s1 + $0xa0] sm:$0xff]
    %v40 = vld [vmem:[%s1 + $0xa8] sm:$0xff]
    %v41 = vld [vmem:[%s1 + $0xb0] sm:$0xff]
    %v42 = vld [vmem:[%s1 + $0xb8] sm:$0xff]
    %v43 = vld [vmem:[%s1 + $0xc0] sm:$0xff]
    %v44 = vld [vmem:[%s1 + $0xc8] sm:$0xff]
    %v45 = vld [vmem:[%s1 + $0xd0] sm:$0xff]
    %v46 = vld [vmem:[%s1 + $0xd8] sm:$0xff]
    %v47 = vld [vmem:[%s1 + $0xe0] sm:$0xff]
    %v48 = vld [vmem:[%s1 + $0xe8] sm:$0xff]
    %v49 = vld [vmem:[%s1 + $0xf0] sm:$0xff]
    %v50 = vld [vmem:[%s1 + $0xf8] sm:$0xff]
    %v51 = vld [vmem:[%s1 + $0x100] sm:$0xff]
    %v52 = vld [vmem:[%s1 + $0x108] sm:$0xff]
    %v53 = vld [vmem:[%s1 + $0x110] sm:$0xff]
    %v54 = vld [vmem:[%s1 + $0x118] sm:$0xff]
    %v55 = vld [vmem:[%s1 + $0x120] sm:$0xff]
    %v56 = vld [vmem:[%s1 + $0x128] sm:$0xff]
    %v57 = vld [vmem:[%s1 + $0x130] sm:$0xff]
    %v58 = vld [vmem:[%s1 + $0x138] sm:$0xff]
    %v59 = vld [vmem:[%s1 + $0x140] sm:$0xff]
    %v60 = vld [vmem:[%s1 + $0x148] sm:$0xff]
    %v61 = vld [vmem:[%s1 + $0x150] sm:$0xff]
    %v62 = vld [vmem:[%s1 + $0x158] sm:$0xff]
    %v63 = vld [vmem:[%s1 + $0x160] sm:$0xff]
    %v64 = vld [vmem:[%s1 + $0x168] sm:$0xff]
    %v65 = vld [vmem:[%s1 + $0x170] sm:$0xff]
    %v66 = vld [vmem:[%s1 + $0x178] sm:$0xff]
    %v67 = vld [vmem:[%s1 + $0x180] sm:$0xff]
    %v68 = vld [vmem:[%s1 + $0x188] sm:$0xff]
    %v69 = vld [vmem:[%s1 + $0x190] sm:$0xff]
    %v70 = vld [vmem:[%s1 + $0x198] sm:$0xff]
    %v71 = vld [vmem:[%s1 + $0x1a0] sm:$0xff]
    %v72 = vld [vmem:[%s1 + $0x1a8] sm:$0xff]
    %v73 = vld [vmem:[%s1 + $0x1b0] sm:$0xff]
    %v74 = vld [vmem:[%s1 + $0x1b8] sm:$0xff]
    %v75 = vld [vmem:[%s1 + $0x1c0] sm:$0xff]
    %v76 = vld [vmem:[%s1 + $0x1c8] sm:$0xff]
    %v77 = vld [vmem:[%s1 + $0x1d0] sm:$0xff]
    %v78 = vld [vmem:[%s1 + $0x1d8] sm:$0xff]
    %v79 = vld [vmem:[%s1 + $0x1e0] sm:$0xff]
    %v80 = vld [vmem:[%s1 + $0x1e8] sm:$0xff]
    %v81 = vld [vmem:[%s1 + $0x1f0] sm:$0xff]
    %v82 = vld [vmem:[%s1 + $0x1f8] sm:$0xff]
    %v83 = vld [vmem:[%s1 + $0x200] sm:$0xff]
    %v84 = vld [vmem:[%s1 + $0x208] sm:$0xff]
    %v85 = vld [vmem:[%s1 + $0x210] sm:$0xff]
    %v86 = vld [vmem:[%s1 + $0x218] sm:$0xff]
    %v87 = vld [vmem:[%s1 + $0x220] sm:$0xff]
    %v88 = vld [vmem:[%s1 + $0x228] sm:$0xff]
    %v89 = vld [vmem:[%s1 + $0x230] sm:$0xff]
    %v90 = vld [vmem:[%s1 + $0x238] sm:$0xff]
    %v91 = vld [vmem:[%s1 + $0x240] sm:$0xff]
    %v92 = vld [vmem:[%s1 + $0x248] sm:$0xff]
    %v93 = vld [vmem:[%s1 + $0x250] sm:$0xff]
    %v94 = vld [vmem:[%s1 + $0x258] sm:$0xff]
    %v95 = vld [vmem:[%s1 + $0x260] sm:$0xff]
    %v96 = vld [vmem:[%s1 + $0x268] sm:$0xff]
    %v97 = vld [vmem:[%s1 + $0x270] sm:$0xff]
    %v98 = vld [vmem:[%s1 + $0x278] sm:$0xff]
    %v99 = vld [vmem:[%s1 + $0x280] sm:$0xff]
    %v100 = vld [vmem:[%s1 + $0x288] sm:$0xff]
    %v101 = vld [vmem:[%s1 + $0x290] sm:$0xff]
    %v102 = vld [vmem:[%s1 + $0x298] sm:$0xff]
    %v103 = vld [vmem:[%s1 + $0x2a0] sm:$0xff]
    %v104 = vld [vmem:[%s1 + $0x2a8] sm:$0xff]
    %v105 = vld [vmem:[%s1 + $0x2b0] sm:$0xff]
    %v106 = vld [vmem:[%s1 + $0x2b8] sm:$0xff]
    %v107 = vld [vmem:[%s1 + $0x2c0] sm:$0xff]
    %v108 = vld [vmem:[%s1 + $0x2c8] sm:$0xff]
    %v109 = vld [vmem:[%s1 + $0x2d0] sm:$0xff]
    %v110 = vld [vmem:[%s1 + $0x2d8] sm:$0xff]
    %v111 = vld [vmem:[%s1 + $0x2e0] sm:$0xff]
    %v112 = vld [vmem:[%s1 + $0x2e8] sm:$0xff]
    %v113 = vld [vmem:[%s1 + $0x2f0] sm:$0xff]
    %v114 = vld [vmem:[%s1 + $0x2f8] sm:$0xff]
    %v115 = vld [vmem:[%s1 + $0x300] sm:$0xff]
    %v116 = vld [vmem:[%s1 + $0x308] sm:$0xff]
    %v117 = vld [vmem:[%s1 + $0x310] sm:$0xff]
    %v118 = vld [vmem:[%s1 + $0x318] sm:$0xff]
    %v119 = vld [vmem:[%s1 + $0x320] sm:$0xff]
    %v120 = vld [vmem:[%s1 + $0x328] sm:$0xff]
    %v121 = vld [vmem:[%s1 + $0x330] sm:$0xff]
    %v122 = vld [vmem:[%s1 + $0x338] sm:$0xff]
    %v123 = vld [vmem:[%s1 + $0x340] sm:$0xff]
    %v124 = vld [vmem:[%s1 + $0x348] sm:$0xff]
    %v125 = vld [vmem:[%s1 + $0x350] sm:$0xff]
    %v126 = vld [vmem:[%s1 + $0x358] sm:$0xff]
    %v127 = vld [vmem:[%s1 + $0x360] sm:$0xff]
    %v128 = vld [vmem:[%s1 + $0x368] sm:$0xff]
    %v129 = vld [vmem:[%s1 + $0x370] sm:$0xff]
    %v130 = vld [vmem:[%s1 + $0x378] sm:$0xff]
    %v131 = vld [vmem:[%s1 + $0x380] sm:$0xff]
    %v132 = vld [vmem:[%s1 + $0x388] sm:$0xff]
    %v133 = vld [vmem:[%s1 + $0x390] sm:$0xff]
    %v134 = vld [vmem:[%s1 + $0x398] sm:$0xff]
    %v135 = vld [vmem:[%s1 + $0x3a0] sm:$0xff]
    %v136 = vld [vmem:[%s1 + $0x3a8] sm:$0xff]
    %v137 = vld [vmem:[%s1 + $0x3b0] sm:$0xff]
    %v138 = vld [vmem:[%s1 + $0x3b8] sm:$0xff]
    %v139 = vld [vmem:[%s1 + $0x3c0] sm:$0xff]
    %v140 = vld [vmem:[%s1 + $0x3c8] sm:$0xff]
    %v141 = vld [vmem:[%s1 + $0x3d0] sm:$0xff]
    %v142 = vld [vmem:[%s1 + $0x3d8] sm:$0xff]
    %v143 = vld [vmem:[%s1 + $0x3e0] sm:$0xff]
    %v144 = vld [vmem:[%s1 + $0x3e8] sm:$0xff]
    %v145 = vld [vmem:[%s1 + $0x3f0] sm:$0xff]
    %v146 = vld [vmem:[%s1 + $0x3f8] sm:$0xff]
    %v147 = vld [vmem:[%s1 + $0x400] sm:$0xff]
    %v148 = vld [vmem:[%s1 + $0x408] sm:$0xff]
    %v149 = vld [vmem:[%s1 + $0x410] sm:$0xff]
    %v150 = vld [vmem:[%s1 + $0x418] sm:$0xff]
    %v151 = vld [vmem:[%s1 + $0x420] sm:$0xff]
    %v152 = vld [vmem:[%s1 + $0x428] sm:$0xff]
    %v153 = vld [vmem:[%s1 + $0x430] sm:$0xff]
    %v154 = vld [vmem:[%s1 + $0x438] sm:$0xff]
    %v155 = vld [vmem:[%s1 + $0x440] sm:$0xff]
    %v156 = vld [vmem:[%s1 + $0x448] sm:$0xff]
    %v157 = vld [vmem:[%s1 + $0x450] sm:$0xff]
    %v158 = vld [vmem:[%s1 + $0x458] sm:$0xff]
    %v159 = vld [vmem:[%s1 + $0x460] sm:$0xff]
    %v160 = vld [vmem:[%s1 + $0x468] sm:$0xff]
    %v161 = vld [vmem:[%s1 + $0x470] sm:$0xff]
    %v162 = vld [vmem:[%s1 + $0x478] sm:$0xff]
    %v163 = vld [vmem:[%s1 + $0x480] sm:$0xff]
    %v164 = vld [vmem:[%s1 + $0x488] sm:$0xff]
    %v165 = vld [vmem:[%s1 + $0x490] sm:$0xff]
    %v166 = vld [vmem:[%s1 + $0x498] sm:$0xff]
    %v167 = vld [vmem:[%s1 + $0x4a0] sm:$0xff]
    %v168 = vld [vmem:[%s1 + $0x4a8] sm:$0xff]
    %v169 = vld [vmem:[%s1 + $0x4b0] sm:$0xff]
    %v170 = vld [vmem:[%s1 + $0x4b8] sm:$0xff]
    %v171 = vld [vmem:[%s1 + $0x4c0] sm:$0xff]
    %v172 = vld [vmem:[%s1 + $0x4c8] sm:$0xff]
    %v173 = vld [vmem:[%s1 + $0x4d0] sm:$0xff]
    %v174 = vld [vmem:[%s1 + $0x4d8] sm:$0xff]
    %v175 = vld [vmem:[%s1 + $0x4e0] sm:$0xff]
    %v176 = vld [vmem:[%s1 + $0x4e8] sm:$0xff]
    %v177 = vld [vmem:[%s1 + $0x4f0] sm:$0xff]
    %v178 = vld [vmem:[%s1 + $0x4f8] sm:$0xff]
    %v179 = vld [vmem:[%s1 + $0x500] sm:$0xff]
    %v180 = vld [vmem:[%s1 + $0x508] sm:$0xff]
    %v181 = vld [vmem:[%s1 + $0x510] sm:$0xff]
    %v182 = vld [vmem:[%s1 + $0x518] sm:$0xff]
    %v183 = vld [vmem:[%s1 + $0x520] sm:$0xff]
    %v184 = vld [vmem:[%s1 + $0x528] sm:$0xff]
    %v185 = vld [vmem:[%s1 + $0x530] sm:$0xff]
    %v186 = vld [vmem:[%s1 + $0x538] sm:$0xff]
    %v187 = vld [vmem:[%s1 + $0x540] sm:$0xff]
    %v188 = vld [vmem:[%s1 + $0x548] sm:$0xff]
    %v189 = vld [vmem:[%s1 + $0x550] sm:$0xff]
    %v190 = vld [vmem:[%s1 + $0x558] sm:$0xff]
    %v191 = vld [vmem:[%s1 + $0x560] sm:$0xff]
    %v192 = vld [vmem:[%s1 + $0x568] sm:$0xff]
    %v193 = vld [vmem:[%s1 + $0x570] sm:$0xff]
    %v194 = vld [vmem:[%s1 + $0x578] sm:$0xff]
    %v195 = vld [vmem:[%s1 + $0x580] sm:$0xff]
    %v196 = vld [vmem:[%s1 + $0x588] sm:$0xff]
    %v197 = vld [vmem:[%s1 + $0x590] sm:$0xff]
    %v198 = vld [vmem:[%s1 + $0x598] sm:$0xff]
    %v199 = vld [vmem:[%s1 + $0x5a0] sm:$0xff]
    %v200 = vld [vmem:[%s1 + $0x5a8] sm:$0xff]
    %v201 = vld [vmem:[%s1 + $0x5b0] sm:$0xff]
    %v202 = vld [vmem:[%s1 + $0x5b8] sm:$0xff]
    %v203 = vld [vmem:[%s1 + $0x5c0] sm:$0xff]
    %v204 = vld [vmem:[%s1 + $0x5c8] sm:$0xff]
    %v205 = vld [vmem:[%s1 + $0x5d0] sm:$0xff]
    %v206 = vld [vmem:[%s1 + $0x5d8] sm:$0xff]
    %v207 = vld [vmem:[%s1 + $0x5e0] sm:$0xff]
    %v208 = vld [vmem:[%s1 + $0x5e8] sm:$0xff]
    %v209 = vld [vmem:[%s1 + $0x5f0] sm:$0xff]
    %v210 = vld [vmem:[%s1 + $0x5f8] sm:$0xff]
    %v211 = vld [vmem:[%s1 + $0x600] sm:$0xff]
    %v212 = vld [vmem:[%s1 + $0x608] sm:$0xff]
    %v213 = vld [vmem:[%s1 + $0x610] sm:$0xff]
    %v214 = vld [vmem:[%s1 + $0x618] sm:$0xff]
    %v215 = vld [vmem:[%s1 + $0x620] sm:$0xff]
    %v216 = vld [vmem:[%s1 + $0x628] sm:$0xff]
    %v217 = vld [vmem:[%s1 + $0x630] sm:$0xff]
    %v218 = vld [vmem:[%s1 + $0x638] sm:$0xff]
    %v219 = vld [vmem:[%s1 + $0x640] sm:$0xff]
    %v220 = vld [vmem:[%s1 + $0x648] sm:$0xff]
    %v221 = vld [vmem:[%s1 + $0x650] sm:$0xff]
    %v222 = vld [vmem:[%s1 + $0x658] sm:$0xff]
    %v223 = vld [vmem:[%s1 + $0x660] sm:$0xff]
    %v224 = vld [vmem:[%s1 + $0x668] sm:$0xff]
    %v225 = vld [vmem:[%s1 + $0x670] sm:$0xff]
    %v226 = vld [vmem:[%s1 + $0x678] sm:$0xff]
    %v227 = vld [vmem:[%s1 + $0x680] sm:$0xff]
    %v228 = vld [vmem:[%s1 + $0x688] sm:$0xff]
    %v229 = vld [vmem:[%s1 + $0x690] sm:$0xff]
    %v230 = vld [vmem:[%s1 + $0x698] sm:$0xff]
    %v231 = vld [vmem:[%s1 + $0x6a0] sm:$0xff]
    %v232 = vld [vmem:[%s1 + $0x6a8] sm:$0xff]
    %v233 = vld [vmem:[%s1 + $0x6b0] sm:$0xff]
    %v234 = vld [vmem:[%s1 + $0x6b8] sm:$0xff]
    %v235 = vld [vmem:[%s1 + $0x6c0] sm:$0xff]
    %v236 = vld [vmem:[%s1 + $0x6c8] sm:$0xff]
    %v237 = vld [vmem:[%s1 + $0x6d0] sm:$0xff]
    %v238 = vld [vmem:[%s1 + $0x6d8] sm:$0xff]
    %v239 = vld [vmem:[%s1 + $0x6e0] sm:$0xff]
    %v240 = vld [vmem:[%s1 + $0x6e8] sm:$0xff]
    %v241 = vld [vmem:[%s1 + $0x6f0] sm:$0xff]
    %v242 = vld [vmem:[%s1 + $0x6f8] sm:$0xff]
    %v243 = vld [vmem:[%s1 + $0x700] sm:$0xff]
    %v244 = vld [vmem:[%s1 + $0x708] sm:$0xff]
    %v245 = vld [vmem:[%s1 + $0x710] sm:$0xff]
    %v246 = vld [vmem:[%s1 + $0x718] sm:$0xff]
    %v247 = vld [vmem:[%s1 + $0x720] sm:$0xff]
    %v248 = vld [vmem:[%s1 + $0x728] sm:$0xff]
    %v249 = vld [vmem:[%s1 + $0x730] sm:$0xff]
    %v250 = vld [vmem:[%s1 + $0x738] sm:$0xff]
    %v251 = vld [vmem:[%s1 + $0x740] sm:$0xff]
    %v252 = vld [vmem:[%s1 + $0x748] sm:$0xff]
    %v253 = vld [vmem:[%s1 + $0x750] sm:$0xff]
    %v254 = vld [vmem:[%s1 + $0x758] sm:$0xff]
    %v255 = vld [vmem:[%s1 + $0x760] sm:$0xff]
    %v256 = vld [vmem:[%s1 + $0x768] sm:$0xff]
    %v257 = vld [vmem:[%s1 + $0x770] sm:$0xff]
    %v258 = vld [vmem:[%s1 + $0x778] sm:$0xff]
    %v259 = vld [vmem:[%s1 + $0x780] sm:$0xff]
    %v260 = vld [vmem:[%s1 + $0x788] sm:$0xff]
    %v261 = vld [vmem:[%s1 + $0x790] sm:$0xff]
    %v262 = vld [vmem:[%s1 + $0x798] sm:$0xff]
    %v263 = vld [vmem:[%s1 + $0x7a0] sm:$0xff]
    %v264 = vld [vmem:[%s1 + $0x7a8] sm:$0xff]
    %v265 = vld [vmem:[%s1 + $0x7b0] sm:$0xff]
    %v266 = vld [vmem:[%s1 + $0x7b8] sm:$0xff]
    %v267 = vld [vmem:[%s1 + $0x7c0] sm:$0xff]
    %v268 = vld [vmem:[%s1 + $0x7c8] sm:$0xff]
    %v269 = vld [vmem:[%s1 + $0x7d0] sm:$0xff]
    %v270 = vld [vmem:[%s1 + $0x7d8] sm:$0xff]
    %v271 = vld [vmem:[%s1 + $0x7e0] sm:$0xff]
    %v272 = vld [vmem:[%s1 + $0x7e8] sm:$0xff]
    %v273 = vld [vmem:[%s1 + $0x7f0] sm:$0xff]
    %v274 = vld [vmem:[%s1 + $0x7f8] sm:$0xff]
    %v275 = vld [vmem:[%s2] sm:$0x1]
    %v277 = vlaneseq
    %v278 = vshrl.u32 %v277, 7
    %v279 = vsub.s32 0, %v278
    %v280 = vrot.slane %v275, %v279
    %v286 = vcombine.high %v15, %v15
    %v288 = vunpack.c.l.s4 1983009808
    %v289 = vunpack.c.0.s8 %v288
    %v290 = vlaneseq
    %v291 = vshrl.u32 %v290, 7
    %v292 = vsub.s32 %v289, %v291
    %v293 = vrot.slane %v15, %v292
    %v295 = vunpack.c.l.s4 1983009808
    %v296 = vunpack.c.0.s8 %v295
    %v297 = vlaneseq
    %v298 = vshrl.u32 %v297, 7
    %v299 = vsub.s32 %v296, %v298
    %v300 = vrot.slane %v286, %v299
    %v301 = vcombine.high %v293, %v293
    %v302 = vcombine.high %v300, %v300
    %v303 = vcombine.high %v16, %v16
    %v305 = vunpack.c.l.s4 1983009808
    %v306 = vunpack.c.0.s8 %v305
    %v307 = vlaneseq
    %v308 = vshrl.u32 %v307, 7
    %v309 = vsub.s32 %v306, %v308
    %v310 = vrot.slane %v16, %v309
    %v312 = vunpack.c.l.s4 1983009808
    %v313 = vunpack.c.0.s8 %v312
    %v314 = vlaneseq
    %v315 = vshrl.u32 %v314, 7
    %v316 = vsub.s32 %v313, %v315
    %v317 = vrot.slane %v303, %v316
    %v318 = vcombine.high %v310, %v310
    %v319 = vcombine.high %v317, %v317
    %v320 = vcombine.high %v17, %v17
    %v322 = vunpack.c.l.s4 1983009808
    %v323 = vunpack.c.0.s8 %v322
    %v324 = vlaneseq
    %v325 = vshrl.u32 %v324, 7
    %v326 = vsub.s32 %v323, %v325
    %v327 = vrot.slane %v17, %v326
    %v329 = vunpack.c.l.s4 1983009808
    %v330 = vunpack.c.0.s8 %v329
    %v331 = vlaneseq
    %v332 = vshrl.u32 %v331, 7
    %v333 = vsub.s32 %v330, %v332
    %v334 = vrot.slane %v320, %v333
    %v335 = vcombine.high %v327, %v327
    %v336 = vcombine.high %v334, %v334
    %v337 = vcombine.high %v18, %v18
    %v339 = vunpack.c.l.s4 1983009808
    %v340 = vunpack.c.0.s8 %v339
    %v341 = vlaneseq
    %v342 = vshrl.u32 %v341, 7
    %v343 = vsub.s32 %v340, %v342
    %v344 = vrot.slane %v18, %v343
    %v346 = vunpack.c.l.s4 1983009808
    %v347 = vunpack.c.0.s8 %v346
    %v348 = vlaneseq
    %v349 = vshrl.u32 %v348, 7
    %v350 = vsub.s32 %v347, %v349
    %v351 = vrot.slane %v337, %v350
    %v352 = vcombine.high %v344, %v344
    %v353 = vcombine.high %v351, %v351
    %370 = vmatprep.subr.mxu0 0.0
    %371 = vmatpush1.msra.mxu0 %v19
    %372 = vmatprep.subr.mxu0 0.0
    %373 = vmatpush1.msra.mxu0 %v20
    %374 = vmatprep.subr.mxu0 0.0
    %375 = vmatpush1.msra.mxu0 %v21
    %376 = vmatprep.subr.mxu0 0.0
    %377 = vmatpush1.msra.mxu0 %v22
    %378 = vmatprep.subr.mxu0 0.0
    %379 = vmatpush1.msra.mxu0 %v23
    %380 = vmatprep.subr.mxu0 0.0
    %381 = vmatpush1.msra.mxu0 %v24
    %382 = vmatprep.subr.mxu0 0.0
    %383 = vmatpush1.msra.mxu0 %v25
    %384 = vmatprep.subr.mxu0 0.0
    %385 = vmatpush1.msra.mxu0 %v26
    %386 = vmatprep.subr.mxu0 0.0
    %387 = vmatpush1.msra.mxu0 %v27
    %388 = vmatprep.subr.mxu0 0.0
    %389 = vmatpush1.msra.mxu0 %v28
    %390 = vmatprep.subr.mxu0 0.0
    %391 = vmatpush1.msra.mxu0 %v29
    %392 = vmatprep.subr.mxu0 0.0
    %393 = vmatpush1.msra.mxu0 %v30
    %394 = vmatprep.subr.mxu0 0.0
    %395 = vmatpush1.msra.mxu0 %v31
    %396 = vmatprep.subr.mxu0 0.0
    %397 = vmatpush1.msra.mxu0 %v32
    %398 = vmatprep.subr.mxu0 0.0
    %399 = vmatpush1.msra.mxu0 %v33
    %400 = vmatprep.subr.mxu0 0.0
    %401 = vmatpush1.msra.mxu0 %v34
    %402 = vmatprep.subr.mxu0 0.0
    %403 = vmatpush1.msra.mxu0 %v35
    %404 = vmatprep.subr.mxu0 0.0
    %405 = vmatpush1.msra.mxu0 %v36
    %406 = vmatprep.subr.mxu0 0.0
    %407 = vmatpush1.msra.mxu0 %v37
    %408 = vmatprep.subr.mxu0 0.0
    %409 = vmatpush1.msra.mxu0 %v38
    %410 = vmatprep.subr.mxu0 0.0
    %411 = vmatpush1.msra.mxu0 %v39
    %412 = vmatprep.subr.mxu0 0.0
    %413 = vmatpush1.msra.mxu0 %v40
    %414 = vmatprep.subr.mxu0 0.0
    %415 = vmatpush1.msra.mxu0 %v41
    %416 = vmatprep.subr.mxu0 0.0
    %417 = vmatpush1.msra.mxu0 %v42
    %418 = vmatprep.subr.mxu0 0.0
    %419 = vmatpush1.msra.mxu0 %v43
    %420 = vmatprep.subr.mxu0 0.0
    %421 = vmatpush1.msra.mxu0 %v44
    %422 = vmatprep.subr.mxu0 0.0
    %423 = vmatpush1.msra.mxu0 %v45
    %424 = vmatprep.subr.mxu0 0.0
    %425 = vmatpush1.msra.mxu0 %v46
    %426 = vmatprep.subr.mxu0 0.0
    %427 = vmatpush1.msra.mxu0 %v47
    %428 = vmatprep.subr.mxu0 0.0
    %429 = vmatpush1.msra.mxu0 %v48
    %430 = vmatprep.subr.mxu0 0.0
    %431 = vmatpush1.msra.mxu0 %v49
    %432 = vmatprep.subr.mxu0 0.0
    %433 = vmatpush1.msra.mxu0 %v50
    %434 = vmatprep.mubr.f32.mxu0 %v301
    %435 = vmatmul.mubr.f32.gmra.mrb[0].mxu0 %v293
    %v436 = vpop.f32.mrb[0].mxu0
    %v437 = vadd.f32 %v280, %v436
    %v438 = vpop.f32.mrb[0].mxu0
    %439 = vdwg.mxu0
    %440 = vmatprep.subr.mxu0 0.0
    %441 = vmatpush1.msra.mxu0 %v51
    %442 = vmatprep.subr.mxu0 0.0
    %443 = vmatpush1.msra.mxu0 %v52
    %444 = vmatprep.subr.mxu0 0.0
    %445 = vmatpush1.msra.mxu0 %v53
    %446 = vmatprep.subr.mxu0 0.0
    %447 = vmatpush1.msra.mxu0 %v54
    %448 = vmatprep.subr.mxu0 0.0
    %449 = vmatpush1.msra.mxu0 %v55
    %450 = vmatprep.subr.mxu0 0.0
    %451 = vmatpush1.msra.mxu0 %v56
    %452 = vmatprep.subr.mxu0 0.0
    %453 = vmatpush1.msra.mxu0 %v57
    %454 = vmatprep.subr.mxu0 0.0
    %455 = vmatpush1.msra.mxu0 %v58
    %456 = vmatprep.subr.mxu0 0.0
    %457 = vmatpush1.msra.mxu0 %v59
    %458 = vmatprep.subr.mxu0 0.0
    %459 = vmatpush1.msra.mxu0 %v60
    %460 = vmatprep.subr.mxu0 0.0
    %461 = vmatpush1.msra.mxu0 %v61
    %462 = vmatprep.subr.mxu0 0.0
    %463 = vmatpush1.msra.mxu0 %v62
    %464 = vmatprep.subr.mxu0 0.0
    %465 = vmatpush1.msra.mxu0 %v63
    %466 = vmatprep.subr.mxu0 0.0
    %467 = vmatpush1.msra.mxu0 %v64
    %468 = vmatprep.subr.mxu0 0.0
    %469 = vmatpush1.msra.mxu0 %v65
    %470 = vmatprep.subr.mxu0 0.0
    %471 = vmatpush1.msra.mxu0 %v66
    %472 = vmatprep.subr.mxu0 0.0
    %473 = vmatpush1.msra.mxu0 %v67
    %474 = vmatprep.subr.mxu0 0.0
    %475 = vmatpush1.msra.mxu0 %v68
    %476 = vmatprep.subr.mxu0 0.0
    %477 = vmatpush1.msra.mxu0 %v69
    %478 = vmatprep.subr.mxu0 0.0
    %479 = vmatpush1.msra.mxu0 %v70
    %480 = vmatprep.subr.mxu0 0.0
    %481 = vmatpush1.msra.mxu0 %v71
    %482 = vmatprep.subr.mxu0 0.0
    %483 = vmatpush1.msra.mxu0 %v72
    %484 = vmatprep.subr.mxu0 0.0
    %485 = vmatpush1.msra.mxu0 %v73
    %486 = vmatprep.subr.mxu0 0.0
    %487 = vmatpush1.msra.mxu0 %v74
    %488 = vmatprep.subr.mxu0 0.0
    %489 = vmatpush1.msra.mxu0 %v75
    %490 = vmatprep.subr.mxu0 0.0
    %491 = vmatpush1.msra.mxu0 %v76
    %492 = vmatprep.subr.mxu0 0.0
    %493 = vmatpush1.msra.mxu0 %v77
    %494 = vmatprep.subr.mxu0 0.0
    %495 = vmatpush1.msra.mxu0 %v78
    %496 = vmatprep.subr.mxu0 0.0
    %497 = vmatpush1.msra.mxu0 %v79
    %498 = vmatprep.subr.mxu0 0.0
    %499 = vmatpush1.msra.mxu0 %v80
    %500 = vmatprep.subr.mxu0 0.0
    %501 = vmatpush1.msra.mxu0 %v81
    %502 = vmatprep.subr.mxu0 0.0
    %503 = vmatpush1.msra.mxu0 %v82
    %504 = vmatprep.mubr.f32.mxu0 %v302
    %505 = vmatmul.mubr.f32.gmra.mrb[0].mxu0 %v300
    %v506 = vpop.f32.mrb[0].mxu0
    %v507 = vadd.f32 %v437, %v506
    %v508 = vpop.f32.mrb[0].mxu0
    %509 = vdwg.mxu0
    %510 = vmatprep.subr.mxu0 0.0
    %511 = vmatpush1.msra.mxu0 %v83
    %512 = vmatprep.subr.mxu0 0.0
    %513 = vmatpush1.msra.mxu0 %v84
    %514 = vmatprep.subr.mxu0 0.0
    %515 = vmatpush1.msra.mxu0 %v85
    %516 = vmatprep.subr.mxu0 0.0
    %517 = vmatpush1.msra.mxu0 %v86
    %518 = vmatprep.subr.mxu0 0.0
    %519 = vmatpush1.msra.mxu0 %v87
    %520 = vmatprep.subr.mxu0 0.0
    %521 = vmatpush1.msra.mxu0 %v88
    %522 = vmatprep.subr.mxu0 0.0
    %523 = vmatpush1.msra.mxu0 %v89
    %524 = vmatprep.subr.mxu0 0.0
    %525 = vmatpush1.msra.mxu0 %v90
    %526 = vmatprep.subr.mxu0 0.0
    %527 = vmatpush1.msra.mxu0 %v91
    %528 = vmatprep.subr.mxu0 0.0
    %529 = vmatpush1.msra.mxu0 %v92
    %530 = vmatprep.subr.mxu0 0.0
    %531 = vmatpush1.msra.mxu0 %v93
    %532 = vmatprep.subr.mxu0 0.0
    %533 = vmatpush1.msra.mxu0 %v94
    %534 = vmatprep.subr.mxu0 0.0
    %535 = vmatpush1.msra.mxu0 %v95
    %536 = vmatprep.subr.mxu0 0.0
    %537 = vmatpush1.msra.mxu0 %v96
    %538 = vmatprep.subr.mxu0 0.0
    %539 = vmatpush1.msra.mxu0 %v97
    %540 = vmatprep.subr.mxu0 0.0
    %541 = vmatpush1.msra.mxu0 %v98
    %542 = vmatprep.subr.mxu0 0.0
    %543 = vmatpush1.msra.mxu0 %v99
    %544 = vmatprep.subr.mxu0 0.0
    %545 = vmatpush1.msra.mxu0 %v100
    %546 = vmatprep.subr.mxu0 0.0
    %547 = vmatpush1.msra.mxu0 %v101
    %548 = vmatprep.subr.mxu0 0.0
    %549 = vmatpush1.msra.mxu0 %v102
    %550 = vmatprep.subr.mxu0 0.0
    %551 = vmatpush1.msra.mxu0 %v103
    %552 = vmatprep.subr.mxu0 0.0
    %553 = vmatpush1.msra.mxu0 %v104
    %554 = vmatprep.subr.mxu0 0.0
    %555 = vmatpush1.msra.mxu0 %v105
    %556 = vmatprep.subr.mxu0 0.0
    %557 = vmatpush1.msra.mxu0 %v106
    %558 = vmatprep.subr.mxu0 0.0
    %559 = vmatpush1.msra.mxu0 %v107
    %560 = vmatprep.subr.mxu0 0.0
    %561 = vmatpush1.msra.mxu0 %v108
    %562 = vmatprep.subr.mxu0 0.0
    %563 = vmatpush1.msra.mxu0 %v109
    %564 = vmatprep.subr.mxu0 0.0
    %565 = vmatpush1.msra.mxu0 %v110
    %566 = vmatprep.subr.mxu0 0.0
    %567 = vmatpush1.msra.mxu0 %v111
    %568 = vmatprep.subr.mxu0 0.0
    %569 = vmatpush1.msra.mxu0 %v112
    %570 = vmatprep.subr.mxu0 0.0
    %571 = vmatpush1.msra.mxu0 %v113
    %572 = vmatprep.subr.mxu0 0.0
    %573 = vmatpush1.msra.mxu0 %v114
    %574 = vmatprep.mubr.f32.mxu0 %v318
    %575 = vmatmul.mubr.f32.gmra.mrb[0].mxu0 %v310
    %v576 = vpop.f32.mrb[0].mxu0
    %v577 = vadd.f32 %v507, %v576
    %v578 = vpop.f32.mrb[0].mxu0
    %579 = vdwg.mxu0
    %580 = vmatprep.subr.mxu0 0.0
    %581 = vmatpush1.msra.mxu0 %v115
    %582 = vmatprep.subr.mxu0 0.0
    %583 = vmatpush1.msra.mxu0 %v116
    %584 = vmatprep.subr.mxu0 0.0
    %585 = vmatpush1.msra.mxu0 %v117
    %586 = vmatprep.subr.mxu0 0.0
    %587 = vmatpush1.msra.mxu0 %v118
    %588 = vmatprep.subr.mxu0 0.0
    %589 = vmatpush1.msra.mxu0 %v119
    %590 = vmatprep.subr.mxu0 0.0
    %591 = vmatpush1.msra.mxu0 %v120
    %592 = vmatprep.subr.mxu0 0.0
    %593 = vmatpush1.msra.mxu0 %v121
    %594 = vmatprep.subr.mxu0 0.0
    %595 = vmatpush1.msra.mxu0 %v122
    %596 = vmatprep.subr.mxu0 0.0
    %597 = vmatpush1.msra.mxu0 %v123
    %598 = vmatprep.subr.mxu0 0.0
    %599 = vmatpush1.msra.mxu0 %v124
    %600 = vmatprep.subr.mxu0 0.0
    %601 = vmatpush1.msra.mxu0 %v125
    %602 = vmatprep.subr.mxu0 0.0
    %603 = vmatpush1.msra.mxu0 %v126
    %604 = vmatprep.subr.mxu0 0.0
    %605 = vmatpush1.msra.mxu0 %v127
    %606 = vmatprep.subr.mxu0 0.0
    %607 = vmatpush1.msra.mxu0 %v128
    %608 = vmatprep.subr.mxu0 0.0
    %609 = vmatpush1.msra.mxu0 %v129
    %610 = vmatprep.subr.mxu0 0.0
    %611 = vmatpush1.msra.mxu0 %v130
    %612 = vmatprep.subr.mxu0 0.0
    %613 = vmatpush1.msra.mxu0 %v131
    %614 = vmatprep.subr.mxu0 0.0
    %615 = vmatpush1.msra.mxu0 %v132
    %616 = vmatprep.subr.mxu0 0.0
    %617 = vmatpush1.msra.mxu0 %v133
    %618 = vmatprep.subr.mxu0 0.0
    %619 = vmatpush1.msra.mxu0 %v134
    %620 = vmatprep.subr.mxu0 0.0
    %621 = vmatpush1.msra.mxu0 %v135
    %622 = vmatprep.subr.mxu0 0.0
    %623 = vmatpush1.msra.mxu0 %v136
    %624 = vmatprep.subr.mxu0 0.0
    %625 = vmatpush1.msra.mxu0 %v137
    %626 = vmatprep.subr.mxu0 0.0
    %627 = vmatpush1.msra.mxu0 %v138
    %628 = vmatprep.subr.mxu0 0.0
    %629 = vmatpush1.msra.mxu0 %v139
    %630 = vmatprep.subr.mxu0 0.0
    %631 = vmatpush1.msra.mxu0 %v140
    %632 = vmatprep.subr.mxu0 0.0
    %633 = vmatpush1.msra.mxu0 %v141
    %634 = vmatprep.subr.mxu0 0.0
    %635 = vmatpush1.msra.mxu0 %v142
    %636 = vmatprep.subr.mxu0 0.0
    %637 = vmatpush1.msra.mxu0 %v143
    %638 = vmatprep.subr.mxu0 0.0
    %639 = vmatpush1.msra.mxu0 %v144
    %640 = vmatprep.subr.mxu0 0.0
    %641 = vmatpush1.msra.mxu0 %v145
    %642 = vmatprep.subr.mxu0 0.0
    %643 = vmatpush1.msra.mxu0 %v146
    %644 = vmatprep.mubr.f32.mxu0 %v319
    %645 = vmatmul.mubr.f32.gmra.mrb[0].mxu0 %v317
    %v646 = vpop.f32.mrb[0].mxu0
    %v647 = vadd.f32 %v577, %v646
    %v648 = vpop.f32.mrb[0].mxu0
    %649 = vdwg.mxu0
    %650 = vmatprep.subr.mxu0 0.0
    %651 = vmatpush1.msra.mxu0 %v147
    %652 = vmatprep.subr.mxu0 0.0
    %653 = vmatpush1.msra.mxu0 %v148
    %654 = vmatprep.subr.mxu0 0.0
    %655 = vmatpush1.msra.mxu0 %v149
    %656 = vmatprep.subr.mxu0 0.0
    %657 = vmatpush1.msra.mxu0 %v150
    %658 = vmatprep.subr.mxu0 0.0
    %659 = vmatpush1.msra.mxu0 %v151
    %660 = vmatprep.subr.mxu0 0.0
    %661 = vmatpush1.msra.mxu0 %v152
    %662 = vmatprep.subr.mxu0 0.0
    %663 = vmatpush1.msra.mxu0 %v153
    %664 = vmatprep.subr.mxu0 0.0
    %665 = vmatpush1.msra.mxu0 %v154
    %666 = vmatprep.subr.mxu0 0.0
    %667 = vmatpush1.msra.mxu0 %v155
    %668 = vmatprep.subr.mxu0 0.0
    %669 = vmatpush1.msra.mxu0 %v156
    %670 = vmatprep.subr.mxu0 0.0
    %671 = vmatpush1.msra.mxu0 %v157
    %672 = vmatprep.subr.mxu0 0.0
    %673 = vmatpush1.msra.mxu0 %v158
    %674 = vmatprep.subr.mxu0 0.0
    %675 = vmatpush1.msra.mxu0 %v159
    %676 = vmatprep.subr.mxu0 0.0
    %677 = vmatpush1.msra.mxu0 %v160
    %678 = vmatprep.subr.mxu0 0.0
    %679 = vmatpush1.msra.mxu0 %v161
    %680 = vmatprep.subr.mxu0 0.0
    %681 = vmatpush1.msra.mxu0 %v162
    %682 = vmatprep.subr.mxu0 0.0
    %683 = vmatpush1.msra.mxu0 %v163
    %684 = vmatprep.subr.mxu0 0.0
    %685 = vmatpush1.msra.mxu0 %v164
    %686 = vmatprep.subr.mxu0 0.0
    %687 = vmatpush1.msra.mxu0 %v165
    %688 = vmatprep.subr.mxu0 0.0
    %689 = vmatpush1.msra.mxu0 %v166
    %690 = vmatprep.subr.mxu0 0.0
    %691 = vmatpush1.msra.mxu0 %v167
    %692 = vmatprep.subr.mxu0 0.0
    %693 = vmatpush1.msra.mxu0 %v168
    %694 = vmatprep.subr.mxu0 0.0
    %695 = vmatpush1.msra.mxu0 %v169
    %696 = vmatprep.subr.mxu0 0.0
    %697 = vmatpush1.msra.mxu0 %v170
    %698 = vmatprep.subr.mxu0 0.0
    %699 = vmatpush1.msra.mxu0 %v171
    %700 = vmatprep.subr.mxu0 0.0
    %701 = vmatpush1.msra.mxu0 %v172
    %702 = vmatprep.subr.mxu0 0.0
    %703 = vmatpush1.msra.mxu0 %v173
    %704 = vmatprep.subr.mxu0 0.0
    %705 = vmatpush1.msra.mxu0 %v174
    %706 = vmatprep.subr.mxu0 0.0
    %707 = vmatpush1.msra.mxu0 %v175
    %708 = vmatprep.subr.mxu0 0.0
    %709 = vmatpush1.msra.mxu0 %v176
    %710 = vmatprep.subr.mxu0 0.0
    %711 = vmatpush1.msra.mxu0 %v177
    %712 = vmatprep.subr.mxu0 0.0
    %713 = vmatpush1.msra.mxu0 %v178
    %714 = vmatprep.mubr.f32.mxu0 %v335
    %715 = vmatmul.mubr.f32.gmra.mrb[0].mxu0 %v327
    %v716 = vpop.f32.mrb[0].mxu0
    %v717 = vadd.f32 %v647, %v716
    %v718 = vpop.f32.mrb[0].mxu0
    %719 = vdwg.mxu0
    %720 = vmatprep.subr.mxu0 0.0
    %721 = vmatpush1.msra.mxu0 %v179
    %722 = vmatprep.subr.mxu0 0.0
    %723 = vmatpush1.msra.mxu0 %v180
    %724 = vmatprep.subr.mxu0 0.0
    %725 = vmatpush1.msra.mxu0 %v181
    %726 = vmatprep.subr.mxu0 0.0
    %727 = vmatpush1.msra.mxu0 %v182
    %728 = vmatprep.subr.mxu0 0.0
    %729 = vmatpush1.msra.mxu0 %v183
    %730 = vmatprep.subr.mxu0 0.0
    %731 = vmatpush1.msra.mxu0 %v184
    %732 = vmatprep.subr.mxu0 0.0
    %733 = vmatpush1.msra.mxu0 %v185
    %734 = vmatprep.subr.mxu0 0.0
    %735 = vmatpush1.msra.mxu0 %v186
    %736 = vmatprep.subr.mxu0 0.0
    %737 = vmatpush1.msra.mxu0 %v187
    %738 = vmatprep.subr.mxu0 0.0
    %739 = vmatpush1.msra.mxu0 %v188
    %740 = vmatprep.subr.mxu0 0.0
    %741 = vmatpush1.msra.mxu0 %v189
    %742 = vmatprep.subr.mxu0 0.0
    %743 = vmatpush1.msra.mxu0 %v190
    %744 = vmatprep.subr.mxu0 0.0
    %745 = vmatpush1.msra.mxu0 %v191
    %746 = vmatprep.subr.mxu0 0.0
    %747 = vmatpush1.msra.mxu0 %v192
    %748 = vmatprep.subr.mxu0 0.0
    %749 = vmatpush1.msra.mxu0 %v193
    %750 = vmatprep.subr.mxu0 0.0
    %751 = vmatpush1.msra.mxu0 %v194
    %752 = vmatprep.subr.mxu0 0.0
    %753 = vmatpush1.msra.mxu0 %v195
    %754 = vmatprep.subr.mxu0 0.0
    %755 = vmatpush1.msra.mxu0 %v196
    %756 = vmatprep.subr.mxu0 0.0
    %757 = vmatpush1.msra.mxu0 %v197
    %758 = vmatprep.subr.mxu0 0.0
    %759 = vmatpush1.msra.mxu0 %v198
    %760 = vmatprep.subr.mxu0 0.0
    %761 = vmatpush1.msra.mxu0 %v199
    %762 = vmatprep.subr.mxu0 0.0
    %763 = vmatpush1.msra.mxu0 %v200
    %764 = vmatprep.subr.mxu0 0.0
    %765 = vmatpush1.msra.mxu0 %v201
    %766 = vmatprep.subr.mxu0 0.0
    %767 = vmatpush1.msra.mxu0 %v202
    %768 = vmatprep.subr.mxu0 0.0
    %769 = vmatpush1.msra.mxu0 %v203
    %770 = vmatprep.subr.mxu0 0.0
    %771 = vmatpush1.msra.mxu0 %v204
    %772 = vmatprep.subr.mxu0 0.0
    %773 = vmatpush1.msra.mxu0 %v205
    %774 = vmatprep.subr.mxu0 0.0
    %775 = vmatpush1.msra.mxu0 %v206
    %776 = vmatprep.subr.mxu0 0.0
    %777 = vmatpush1.msra.mxu0 %v207
    %778 = vmatprep.subr.mxu0 0.0
    %779 = vmatpush1.msra.mxu0 %v208
    %780 = vmatprep.subr.mxu0 0.0
    %781 = vmatpush1.msra.mxu0 %v209
    %782 = vmatprep.subr.mxu0 0.0
    %783 = vmatpush1.msra.mxu0 %v210
    %784 = vmatprep.mubr.f32.mxu0 %v336
    %785 = vmatmul.mubr.f32.gmra.mrb[0].mxu0 %v334
    %v786 = vpop.f32.mrb[0].mxu0
    %v787 = vadd.f32 %v717, %v786
    %v788 = vpop.f32.mrb[0].mxu0
    %789 = vdwg.mxu0
    %790 = vmatprep.subr.mxu0 0.0
    %791 = vmatpush1.msra.mxu0 %v211
    %792 = vmatprep.subr.mxu0 0.0
    %793 = vmatpush1.msra.mxu0 %v212
    %794 = vmatprep.subr.mxu0 0.0
    %795 = vmatpush1.msra.mxu0 %v213
    %796 = vmatprep.subr.mxu0 0.0
    %797 = vmatpush1.msra.mxu0 %v214
    %798 = vmatprep.subr.mxu0 0.0
    %799 = vmatpush1.msra.mxu0 %v215
    %800 = vmatprep.subr.mxu0 0.0
    %801 = vmatpush1.msra.mxu0 %v216
    %802 = vmatprep.subr.mxu0 0.0
    %803 = vmatpush1.msra.mxu0 %v217
    %804 = vmatprep.subr.mxu0 0.0
    %805 = vmatpush1.msra.mxu0 %v218
    %806 = vmatprep.subr.mxu0 0.0
    %807 = vmatpush1.msra.mxu0 %v219
    %808 = vmatprep.subr.mxu0 0.0
    %809 = vmatpush1.msra.mxu0 %v220
    %810 = vmatprep.subr.mxu0 0.0
    %811 = vmatpush1.msra.mxu0 %v221
    %812 = vmatprep.subr.mxu0 0.0
    %813 = vmatpush1.msra.mxu0 %v222
    %814 = vmatprep.subr.mxu0 0.0
    %815 = vmatpush1.msra.mxu0 %v223
    %816 = vmatprep.subr.mxu0 0.0
    %817 = vmatpush1.msra.mxu0 %v224
    %818 = vmatprep.subr.mxu0 0.0
    %819 = vmatpush1.msra.mxu0 %v225
    %820 = vmatprep.subr.mxu0 0.0
    %821 = vmatpush1.msra.mxu0 %v226
    %822 = vmatprep.subr.mxu0 0.0
    %823 = vmatpush1.msra.mxu0 %v227
    %824 = vmatprep.subr.mxu0 0.0
    %825 = vmatpush1.msra.mxu0 %v228
    %826 = vmatprep.subr.mxu0 0.0
    %827 = vmatpush1.msra.mxu0 %v229
    %828 = vmatprep.subr.mxu0 0.0
    %829 = vmatpush1.msra.mxu0 %v230
    %830 = vmatprep.subr.mxu0 0.0
    %831 = vmatpush1.msra.mxu0 %v231
    %832 = vmatprep.subr.mxu0 0.0
    %833 = vmatpush1.msra.mxu0 %v232
    %834 = vmatprep.subr.mxu0 0.0
    %835 = vmatpush1.msra.mxu0 %v233
    %836 = vmatprep.subr.mxu0 0.0
    %837 = vmatpush1.msra.mxu0 %v234
    %838 = vmatprep.subr.mxu0 0.0
    %839 = vmatpush1.msra.mxu0 %v235
    %840 = vmatprep.subr.mxu0 0.0
    %841 = vmatpush1.msra.mxu0 %v236
    %842 = vmatprep.subr.mxu0 0.0
    %843 = vmatpush1.msra.mxu0 %v237
    %844 = vmatprep.subr.mxu0 0.0
    %845 = vmatpush1.msra.mxu0 %v238
    %846 = vmatprep.subr.mxu0 0.0
    %847 = vmatpush1.msra.mxu0 %v239
    %848 = vmatprep.subr.mxu0 0.0
    %849 = vmatpush1.msra.mxu0 %v240
    %850 = vmatprep.subr.mxu0 0.0
    %851 = vmatpush1.msra.mxu0 %v241
    %852 = vmatprep.subr.mxu0 0.0
    %853 = vmatpush1.msra.mxu0 %v242
    %854 = vmatprep.mubr.f32.mxu0 %v352
    %855 = vmatmul.mubr.f32.gmra.mrb[0].mxu0 %v344
    %v856 = vpop.f32.mrb[0].mxu0
    %v857 = vadd.f32 %v787, %v856
    %v858 = vpop.f32.mrb[0].mxu0
    %859 = vdwg.mxu0
    %860 = vmatprep.subr.mxu0 0.0
    %861 = vmatpush1.msra.mxu0 %v243
    %862 = vmatprep.subr.mxu0 0.0
    %863 = vmatpush1.msra.mxu0 %v244
    %864 = vmatprep.subr.mxu0 0.0
    %865 = vmatpush1.msra.mxu0 %v245
    %866 = vmatprep.subr.mxu0 0.0
    %867 = vmatpush1.msra.mxu0 %v246
    %868 = vmatprep.subr.mxu0 0.0
    %869 = vmatpush1.msra.mxu0 %v247
    %870 = vmatprep.subr.mxu0 0.0
    %871 = vmatpush1.msra.mxu0 %v248
    %872 = vmatprep.subr.mxu0 0.0
    %873 = vmatpush1.msra.mxu0 %v249
    %874 = vmatprep.subr.mxu0 0.0
    %875 = vmatpush1.msra.mxu0 %v250
    %876 = vmatprep.subr.mxu0 0.0
    %877 = vmatpush1.msra.mxu0 %v251
    %878 = vmatprep.subr.mxu0 0.0
    %879 = vmatpush1.msra.mxu0 %v252
    %880 = vmatprep.subr.mxu0 0.0
    %881 = vmatpush1.msra.mxu0 %v253
    %882 = vmatprep.subr.mxu0 0.0
    %883 = vmatpush1.msra.mxu0 %v254
    %884 = vmatprep.subr.mxu0 0.0
    %885 = vmatpush1.msra.mxu0 %v255
    %886 = vmatprep.subr.mxu0 0.0
    %887 = vmatpush1.msra.mxu0 %v256
    %888 = vmatprep.subr.mxu0 0.0
    %889 = vmatpush1.msra.mxu0 %v257
    %890 = vmatprep.subr.mxu0 0.0
    %891 = vmatpush1.msra.mxu0 %v258
    %892 = vmatprep.subr.mxu0 0.0
    %893 = vmatpush1.msra.mxu0 %v259
    %894 = vmatprep.subr.mxu0 0.0
    %895 = vmatpush1.msra.mxu0 %v260
    %896 = vmatprep.subr.mxu0 0.0
    %897 = vmatpush1.msra.mxu0 %v261
    %898 = vmatprep.subr.mxu0 0.0
    %899 = vmatpush1.msra.mxu0 %v262
    %900 = vmatprep.subr.mxu0 0.0
    %901 = vmatpush1.msra.mxu0 %v263
    %902 = vmatprep.subr.mxu0 0.0
    %903 = vmatpush1.msra.mxu0 %v264
    %904 = vmatprep.subr.mxu0 0.0
    %905 = vmatpush1.msra.mxu0 %v265
    %906 = vmatprep.subr.mxu0 0.0
    %907 = vmatpush1.msra.mxu0 %v266
    %908 = vmatprep.subr.mxu0 0.0
    %909 = vmatpush1.msra.mxu0 %v267
    %910 = vmatprep.subr.mxu0 0.0
    %911 = vmatpush1.msra.mxu0 %v268
    %912 = vmatprep.subr.mxu0 0.0
    %913 = vmatpush1.msra.mxu0 %v269
    %914 = vmatprep.subr.mxu0 0.0
    %915 = vmatpush1.msra.mxu0 %v270
    %916 = vmatprep.subr.mxu0 0.0
    %917 = vmatpush1.msra.mxu0 %v271
    %918 = vmatprep.subr.mxu0 0.0
    %919 = vmatpush1.msra.mxu0 %v272
    %920 = vmatprep.subr.mxu0 0.0
    %921 = vmatpush1.msra.mxu0 %v273
    %922 = vmatprep.subr.mxu0 0.0
    %923 = vmatpush1.msra.mxu0 %v274
    %924 = vmatprep.mubr.f32.mxu0 %v353
    %925 = vmatmul.mubr.f32.gmra.mrb[0].mxu0 %v351
    %v926 = vpop.f32.mrb[0].mxu0
    %v927 = vadd.f32 %v857, %v926
    %v928 = vpop.f32.mrb[0].mxu0
    %929 = vdwg.mxu0
    %vm930 = vcmask 58368
    %931 = vst.msk [vmem:[#allocation2] sm:$0x3] %vm930, %v927
    // Predicated region
    $region14: #{model_wrapper_forward.1} parent=1 // pred_check
      _
    $region15: #{model_wrapper_forward.1} parent=1 // pred_check_branch
      %933 = sbr.rel (0) target = $region17
    $region16: #{model_wrapper_forward.1} parent=1 // pred_region
      %s935 = ssub.s32 32, 32
      %936 = vsyncadd [#allocation3], %s935
      %s938 = sshll.u32 [#allocation2], 4
      %s939 = int_to_ptr.vmem [resolvable:$true] %s938
      %941 = dma.vmem_to_hbm [thread:$0]  %s939, 32, %s3, [#allocation3]
    $region17: #{model_wrapper_forward.1} parent=1 // pred_fallthru
      _
    // Predicated region
    $region18: #{model_wrapper_forward.1} parent=1 // pred_check
      _
    $region19: #{model_wrapper_forward.1} parent=1 // pred_check_branch
      %943 = sbr.rel (0) target = $region21
    $region20: #{model_wrapper_forward.1} parent=1 // pred_region
      %944 = dma.done [#allocation3], 32
    $region21: #{model_wrapper_forward.1} parent=1 // pred_fallthru
      _
    %945 = vsyncpa [#allocation3], 1

</llo_original>
